<compile_context>
chip_gen: v7x
topology: tpu7x:2x2x1
jax: 0.10.0
libtpu: 0.0.40
codegen_flags: <defaults>
</compile_context>

<pallas_src>
import math

import jax
import jax.numpy as jnp
from jax.experimental import pallas as pl
from jax.experimental.pallas import tpu as pltpu


def _make_kernel(k, out_dtype):
    def pos_emb_kernel(pos_ref, fsel_ref, mask_ref, out_ref):
        # pos_ref:  (tile_rows, k)  f32  -- k packed positions per output row
        # fsel_ref: (k, W)          f32  -- row j: inv_freq (x2) in chunk j, 0 elsewhere
        # mask_ref: (1, W)          f32  -- 1.0 on sin lanes, 0.0 on cos lanes
        # out_ref:  (tile_rows, W)  out_dtype
        pos = pos_ref[...]
        fsel = fsel_ref[...]
        # time[r, j*D + c] = pos[r, j] * freq_row[c]; other terms are exact zeros.
        time = pos[:, 0:1] * fsel[0:1, :]              # broadcast -> (tile_rows, W)
        for j in range(1, k):                          # unrolled at trace time
            time = time + pos[:, j:j + 1] * fsel[j:j + 1, :]
        sig = jnp.where(mask_ref[...] != 0.0, jnp.sin(time), jnp.cos(time))
        out_ref[...] = sig.astype(out_dtype)
    return pos_emb_kernel


def positional_embedding(position, output_dim, *, out_dtype=jnp.float32,
                         target_block_bytes=2 << 20):
    """position: array of any shape; returns position.shape + (output_dim,)."""
    assert output_dim % 2 == 0, "output_dim must be even"
    assert output_dim >= 4, "output_dim must be >= 4 (half-1 division)"
    half = output_dim // 2
    d = output_dim

    # Lane-packing factor: pack k positions per output row so W = k*d is a
    # multiple of 128 lanes -> unmasked, lane-dense output stores.
    k = 128 // math.gcd(d, 128)
    w = k * d

    # Deterministic "parameter" (buffer) init, identical to the PyTorch __init__.
    inv_freq = 1.0 / (10000.0 ** (jnp.arange(half, dtype=jnp.float32) / (half - 1)))
    freq_row = jnp.concatenate([inv_freq, inv_freq])                    # (d,)
    # (k, W) selector table: row j holds freq_row in lane chunk j, zeros elsewhere.
    fsel = (jnp.eye(k, dtype=jnp.float32)[:, :, None]
            * freq_row[None, None, :]).reshape(k, w)
    # (1, W) sin/cos lane mask (1.0 -> sin half of each chunk).
    mask = jnp.tile((jnp.arange(d) < half).astype(jnp.float32), (k,)).reshape(1, w)

    orig_shape = position.shape
    pos_flat = jnp.asarray(position, jnp.float32).reshape(-1)
    n = pos_flat.shape[0]

    # Pad only up to a multiple of k (at most k-1 scalars; zero when n % k == 0).
    n_pad = pl.cdiv(n, k) * k
    if n_pad != n:
        pos_flat = jnp.pad(pos_flat, (0, n_pad - n))
    n_rows = n_pad // k
    pos2 = pos_flat.reshape(n_rows, k)

    # Row-tile sizing: ~target_block_bytes per output block, multiple of 8 rows,
    # never larger than the array (ragged last block handled by Pallas masking),
    # and >= 2 grid steps when possible so v7x can shard across its 2 TCs.
    itemsize = jnp.dtype(out_dtype).itemsize
    max_rows = max(8, (target_block_bytes // (w * itemsize)) // 8 * 8)
    if n_rows <= 8:
        tile_rows = n_rows
    else:
        tile_rows = min(max_rows, (n_rows // 8) * 8)
        while pl.cdiv(n_rows, tile_rows) < 2 and tile_rows > 8:
            tile_rows = max(8, (tile_rows // 2) // 8 * 8)
    grid = (pl.cdiv(n_rows, tile_rows),)

    out = pl.pallas_call(
        _make_kernel(k, out_dtype),
        out_shape=jax.ShapeDtypeStruct((n_rows, w), out_dtype),
        grid=grid,
        in_specs=[
            pl.BlockSpec((tile_rows, k), lambda i: (i, 0)),   # packed positions: tiled
            pl.BlockSpec((k, w), lambda i: (0, 0)),           # freq selector: resident
            pl.BlockSpec((1, w), lambda i: (0, 0)),           # sin/cos mask: resident
        ],
        out_specs=pl.BlockSpec((tile_rows, w), lambda i: (i, 0)),
        compiler_params=pltpu.CompilerParams(
            dimension_semantics=("parallel",)),
    )(pos2, fsel, mask)

    # Undo the lane packing: contiguous row-major reinterpretation (free).
    out = out.reshape(n_pad, d)
    if n_pad != n:              # only when n % k != 0 (tiny tail was padded)
        out = out[:n]
    return out.reshape(*orig_shape, d)


if __name__ == "__main__":
    key = jax.random.PRNGKey(0)
    batch, seq, output_dim = 2, 8, 32

    # Example "position" input (e.g. timestep indices as floats).
    position = jax.random.uniform(key, (batch, seq), dtype=jnp.float32) * 100.0

    signal = positional_embedding(position, output_dim)
    signal = jax.block_until_ready(signal)

    # Pure-JAX reference check of the exact PyTorch semantics.
    half = output_dim // 2
    inv_freq = 1.0 / (10000.0 ** (jnp.arange(half, dtype=jnp.float32) / (half - 1)))
    time = position[..., None] * inv_freq
    ref = jnp.concatenate([jnp.sin(time), jnp.cos(time)], axis=-1)

    assert signal.shape == (batch, seq, output_dim)
    assert jnp.allclose(signal, ref, atol=1e-5, rtol=1e-5)
    print("KERNEL_OK")
</pallas_src>

<mosaic_0001>
module attributes {stable_mosaic.version = 11 : i64} {
  func.func @pos_emb_kernel(%arg0: i32, %arg1: memref<4x4xf32, #tpu.memory_space<vmem>>, %arg2: memref<4x128xf32, #tpu.memory_space<vmem>>, %arg3: memref<1x128xf32, #tpu.memory_space<vmem>>, %arg4: memref<4x128xf32, #tpu.memory_space<vmem>>) attributes {dimension_semantics = [#tpu.dimension_semantics<parallel>], iteration_bounds = array<i64: 1>, scalar_prefetch = 0 : i64, scratch_operands = 0 : i64, tpu.core_type = #tpu.core_type<tc>, window_params = [{transform_indices = @transform_0, window_bounds = array<i64: 4, 4>}, {pipeline_mode = #tpu.pipeline_mode<synchronous>, transform_indices = @transform_1, window_bounds = array<i64: 4, 128>}, {pipeline_mode = #tpu.pipeline_mode<synchronous>, transform_indices = @transform_2, window_bounds = array<i64: 1, 128>}, {transform_indices = @transform_3, window_bounds = array<i64: 4, 128>}]} {
    %c0 = arith.constant 0 : index
    %c0_0 = arith.constant 0 : index
    %0 = vector.load %arg1[%c0, %c0_0] : memref<4x4xf32, #tpu.memory_space<vmem>>, vector<4x4xf32>
    %c0_1 = arith.constant 0 : index
    %c0_2 = arith.constant 0 : index
    %1 = vector.load %arg2[%c0_1, %c0_2] : memref<4x128xf32, #tpu.memory_space<vmem>>, vector<4x128xf32>
    %2 = vector.extract_strided_slice %0 {offsets = [0, 0], sizes = [4, 1], strides = [1, 1]} : vector<4x4xf32> to vector<4x1xf32>
    %3 = vector.extract_strided_slice %1 {offsets = [0, 0], sizes = [1, 128], strides = [1, 1]} : vector<4x128xf32> to vector<1x128xf32>
    %4 = vector.broadcast %2 : vector<4x1xf32> to vector<4x128xf32>
    %5 = vector.broadcast %3 : vector<1x128xf32> to vector<4x128xf32>
    %6 = arith.mulf %4, %5 : vector<4x128xf32>
    %7 = vector.extract_strided_slice %0 {offsets = [0, 1], sizes = [4, 1], strides = [1, 1]} : vector<4x4xf32> to vector<4x1xf32>
    %8 = vector.extract_strided_slice %1 {offsets = [1, 0], sizes = [1, 128], strides = [1, 1]} : vector<4x128xf32> to vector<1x128xf32>
    %9 = vector.broadcast %7 : vector<4x1xf32> to vector<4x128xf32>
    %10 = vector.broadcast %8 : vector<1x128xf32> to vector<4x128xf32>
    %11 = arith.mulf %9, %10 : vector<4x128xf32>
    %12 = arith.addf %6, %11 : vector<4x128xf32>
    %13 = vector.extract_strided_slice %0 {offsets = [0, 2], sizes = [4, 1], strides = [1, 1]} : vector<4x4xf32> to vector<4x1xf32>
    %14 = vector.extract_strided_slice %1 {offsets = [2, 0], sizes = [1, 128], strides = [1, 1]} : vector<4x128xf32> to vector<1x128xf32>
    %15 = vector.broadcast %13 : vector<4x1xf32> to vector<4x128xf32>
    %16 = vector.broadcast %14 : vector<1x128xf32> to vector<4x128xf32>
    %17 = arith.mulf %15, %16 : vector<4x128xf32>
    %18 = arith.addf %12, %17 : vector<4x128xf32>
    %19 = vector.extract_strided_slice %0 {offsets = [0, 3], sizes = [4, 1], strides = [1, 1]} : vector<4x4xf32> to vector<4x1xf32>
    %20 = vector.extract_strided_slice %1 {offsets = [3, 0], sizes = [1, 128], strides = [1, 1]} : vector<4x128xf32> to vector<1x128xf32>
    %21 = vector.broadcast %19 : vector<4x1xf32> to vector<4x128xf32>
    %22 = vector.broadcast %20 : vector<1x128xf32> to vector<4x128xf32>
    %23 = arith.mulf %21, %22 : vector<4x128xf32>
    %24 = arith.addf %18, %23 : vector<4x128xf32>
    %c0_3 = arith.constant 0 : index
    %c0_4 = arith.constant 0 : index
    %25 = vector.load %arg3[%c0_3, %c0_4] : memref<1x128xf32, #tpu.memory_space<vmem>>, vector<1x128xf32>
    %cst = arith.constant 0.000000e+00 : f32
    %26 = vector.broadcast %cst : f32 to vector<1x128xf32>
    %27 = arith.cmpf one, %25, %26 : vector<1x128xf32>
    %28 = math.sin %24 : vector<4x128xf32>
    %29 = math.cos %24 : vector<4x128xf32>
    %30 = vector.shape_cast %27 : vector<1x128xi1> to vector<1x128xi1>
    %31 = vector.broadcast %30 : vector<1x128xi1> to vector<4x128xi1>
    %32 = arith.select %31, %28, %29 : vector<4x128xi1>, vector<4x128xf32>
    %c0_5 = arith.constant 0 : index
    %c0_6 = arith.constant 0 : index
    %33 = vector.load %arg4[%c0_5, %c0_6] : memref<4x128xf32, #tpu.memory_space<vmem>>, vector<4x128xf32>
    tpu.vector_store %arg4[%c0_5, %c0_6], %32 {strides = array<i32>} : memref<4x128xf32, #tpu.memory_space<vmem>>, vector<4x128xf32>,
    return
  }
  func.func @transform_0(%arg0: i32) -> (i32, i32) {
    %c0_i32 = arith.constant 0 : i32
    %c0_i32_0 = arith.constant 0 : i32
    return %arg0, %c0_i32 : i32, i32
  }
  func.func @transform_1(%arg0: i32) -> (i32, i32) {
    %c0_i32 = arith.constant 0 : i32
    %c0_i32_0 = arith.constant 0 : i32
    %c0_i32_1 = arith.constant 0 : i32
    return %c0_i32, %c0_i32_0 : i32, i32
  }
  func.func @transform_2(%arg0: i32) -> (i32, i32) {
    %c0_i32 = arith.constant 0 : i32
    %c0_i32_0 = arith.constant 0 : i32
    %c0_i32_1 = arith.constant 0 : i32
    return %c0_i32, %c0_i32_0 : i32, i32
  }
  func.func @transform_3(%arg0: i32) -> (i32, i32) {
    %c0_i32 = arith.constant 0 : i32
    %c0_i32_0 = arith.constant 0 : i32
    return %arg0, %c0_i32 : i32, i32
  }
}

</mosaic_0001>

<llo_original>
// kernel: tpu_custom_call.1
$region0: #{tpu_custom_call.1}
  #allocation0 [shape = 'u32[]', space=smem, size = 0x4, offset = 0x4, fixed_abs, tag = 'smem constant byte address 0x4 - core index']
  #allocation1 [shape = 'u32[144,128]{1,0:T(1,128)}', space=vmem, size = 0x12000, scoped, tag = 'internal scratch']
  %s0 = inlined_call_operand.hbm [shape: f32[4,4], index: 0, kind: input, shape index: {}]
  %s1 = inlined_call_operand.hbm [shape: f32[4,128], index: 1, kind: input, shape index: {}]
  %s2 = inlined_call_operand.vmem [shape: f32[1,128], index: 2, kind: input, shape index: {}]
  %s3 = inlined_call_operand.hbm [shape: f32[4,128], index: 3, kind: output, shape index: {}]
  %s4 = sld [smem:[#allocation0]]
  $region30: #{tpu_custom_call.1} parent=0
    _
  %s6 = ssub.s32 1, %s4
  %s7 = scalar_select 0, %s6, %s4
  $region1: #{tpu_custom_call.1} parent=0
    #allocation2 [shape = 'u8[2048]{0}', space=vmem, size = 0x800, scoped, tag = 'input window, operand 0, single buffered']
    #allocation3 [shape = 's32[1]{0}', space=sflag, size = 0x4, scoped, tag = 'scoped memory for tpu_custom_call.1']
    #allocation4 [shape = 's32[1]{0}', space=sflag, size = 0x4, scoped, tag = 'scoped memory for tpu_custom_call.1']
    #allocation5 [shape = 'u8[2048]{0}', space=vmem, size = 0x800, scoped, tag = 'input window, operand 1, single buffered']
    #allocation6 [shape = 's32[1]{0}', space=sflag, size = 0x4, scoped, tag = 'scoped memory for tpu_custom_call.1']
    #allocation7 [shape = 'u8[2048]{0}', space=vmem, size = 0x800, scoped, tag = 'output window, operand 0, single buffered']
    %8 = vsyncpa [#allocation3], 0
    %9 = vsyncpa [#allocation6], 0
    %10 = vsyncpa [#allocation4], 0
    // Predicated region
    $region2: #{tpu_custom_call.1} parent=1 // pred_check
      _
    $region3: #{tpu_custom_call.1} parent=1 // pred_check_branch
      %12 = sbr.rel (0) target = $region5
    $region4: #{tpu_custom_call.1} parent=1 // pred_region
      %s14 = ssub.s32 64, 64
      %15 = vsyncadd [#allocation3], %s14
      %s17 = sshll.u32 [#allocation2], 4
      %s18 = int_to_ptr.vmem [resolvable:$true] %s17
      %20 = dma.hbm_to_vmem [thread:$0]  %s0, 64, %s18, [#allocation3]
    $region5: #{tpu_custom_call.1} parent=1 // pred_fallthru
      _
    // Predicated region
    $region6: #{tpu_custom_call.1} parent=1 // pred_check
      _
    $region7: #{tpu_custom_call.1} parent=1 // pred_check_branch
      %22 = sbr.rel (0) target = $region9
    $region8: #{tpu_custom_call.1} parent=1 // pred_region
      %s24 = ssub.s32 64, 64
      %25 = vsyncadd [#allocation6], %s24
      %s27 = sshll.u32 [#allocation5], 4
      %s28 = int_to_ptr.vmem [resolvable:$true] %s27
      %30 = dma.hbm_to_vmem [thread:$0]  %s1, 64, %s28, [#allocation6]
    $region9: #{tpu_custom_call.1} parent=1 // pred_fallthru
      _
    // Predicated region
    $region10: #{tpu_custom_call.1} parent=1 // pred_check
      _
    $region11: #{tpu_custom_call.1} parent=1 // pred_check_branch
      %32 = sbr.rel (0) target = $region13
    $region12: #{tpu_custom_call.1} parent=1 // pred_region
      _
    $region13: #{tpu_custom_call.1} parent=1 // pred_fallthru
      _
    // Predicated region
    $region14: #{tpu_custom_call.1} parent=1 // pred_check
      _
    $region15: #{tpu_custom_call.1} parent=1 // pred_check_branch
      %34 = sbr.rel (0) target = $region17
    $region16: #{tpu_custom_call.1} parent=1 // pred_region
      %35 = dma.done [#allocation3], 64
    $region17: #{tpu_custom_call.1} parent=1 // pred_fallthru
      _
    // Predicated region
    $region18: #{tpu_custom_call.1} parent=1 // pred_check
      _
    $region19: #{tpu_custom_call.1} parent=1 // pred_check_branch
      %37 = sbr.rel (0) target = $region21
    $region20: #{tpu_custom_call.1} parent=1 // pred_region
      %38 = dma.done [#allocation6], 64
    $region21: #{tpu_custom_call.1} parent=1 // pred_fallthru
      _
    %v39 = vld [vmem:[#allocation2] sm:$0xf]
    %v40 = vld [vmem:[#allocation5] sm:$0xf]
    %42 = vset.pattern.permute.xlu0 0
    %43 = vperm.xlu0 %42, %v39
    %v44 = vpop.permute.xlu0 %43
    %v46 = vlaneseq
    %v47 = vshrl.u32 %v46, 7
    %v48 = vsub.s32 0, %v47
    %v49 = vrot.slane %v40, %v48
    %v50 = vmul.f32 %v44, %v49
    %51 = vset.pattern.permute.xlu0 1
    %52 = vperm.xlu0 %51, %v39
    %v53 = vpop.permute.xlu0 %52
    %v55 = vlaneseq
    %v56 = vshrl.u32 %v55, 7
    %v57 = vsub.s32 1, %v56
    %v58 = vrot.slane %v40, %v57
    %v59 = vmul.f32 %v53, %v58
    %v60 = vadd.f32 %v50, %v59
    %61 = vset.pattern.permute.xlu0 2
    %62 = vperm.xlu0 %61, %v39
    %v63 = vpop.permute.xlu0 %62
    %v65 = vlaneseq
    %v66 = vshrl.u32 %v65, 7
    %v67 = vsub.s32 2, %v66
    %v68 = vrot.slane %v40, %v67
    %v69 = vmul.f32 %v63, %v68
    %v70 = vadd.f32 %v60, %v69
    %71 = vset.pattern.permute.xlu0 3
    %72 = vperm.xlu0 %71, %v39
    %v73 = vpop.permute.xlu0 %72
    %v75 = vlaneseq
    %v76 = vshrl.u32 %v75, 7
    %v77 = vsub.s32 3, %v76
    %v78 = vrot.slane %v40, %v77
    %v79 = vmul.f32 %v73, %v78
    %v80 = vadd.f32 %v70, %v79
    %v81 = vld [vmem:[%s2] sm:$0x1]
    %vm82 = vcmp.ne.f32.partialorder %v81, 0.0
    %v83 = vand.u32 2147483647, %v80
    %vm84 = vcmp.le.f32.partialorder %v83, 0.7853982
    %vm85 = vcmp.lt.s32.totalorder %v80, 0
    %v86 = vand.u32 %v80, 2139095040
    %v87 = vshrl.u32 %v86, 23
    %v88 = vsub.s32 %v87, 127
    %v89 = vand.u32 2147483647, %v80
    %v90 = vand.u32 %v89, 8388607
    %v91 = vor.u32 %v90, 8388608
    %v92 = vsub.s32 0, %v91
    %v93 = vadd.s32 %v88, 1
    %vm94 = vcmp.gt.s32.totalorder %v93, 0
    %v95 = vsel %vm94, %v93, 0
    %v96 = vshrl.u32 %v95, 5
    %v97 = vand.u32 %v95, 31
    %v98 = vsub.s32 32, %v97
    %v99 = vshrl.u32 683565275, %v98
    %v100 = vshll.u32 683565275, %v97
    %v101 = vshrl.u32 2475754826, %v98
    %v102 = vor.u32 %v100, %v101
    %v103 = vshll.u32 2475754826, %v97
    %v104 = vshrl.u32 2131351028, %v98
    %v105 = vor.u32 %v103, %v104
    %v106 = vshll.u32 2131351028, %v97
    %v107 = vshrl.u32 2102212464, %v98
    %v108 = vor.u32 %v106, %v107
    %v109 = vshll.u32 2102212464, %v97
    %v110 = vshrl.u32 920167782, %v98
    %v111 = vor.u32 %v109, %v110
    %v112 = vshll.u32 920167782, %v97
    %v113 = vshrl.u32 1326507024, %v98
    %v114 = vor.u32 %v112, %v113
    %vm115 = vcmp.lt.s32.totalorder %v96, 1
    %vm116 = vcmp.lt.s32.totalorder %v96, 2
    %vm117 = vcmp.lt.s32.totalorder %v96, 3
    %vm118 = vcmp.lt.s32.totalorder %v96, 4
    %v119 = vsel %vm115, %v99, %v102
    %v120 = vsel %vm118, %v108, 2102212464
    %v121 = vsel %vm117, %v105, %v120
    %v122 = vsel %vm116, %v119, %v121
    %v123 = vsel %vm115, %v102, %v105
    %v124 = vsel %vm118, %v111, 920167782
    %v125 = vsel %vm117, %v108, %v124
    %v126 = vsel %vm116, %v123, %v125
    %v127 = vsel %vm115, %v105, %v108
    %v128 = vsel %vm118, %v114, 1326507024
    %v129 = vsel %vm117, %v111, %v128
    %v130 = vsel %vm116, %v127, %v129
    %v131 = vshll.u32 %v91, 8
    %v132 = vmul.u32.u64.compose %v131, %v130
    %v133 = vextract.low.u32 %v132
    %v134 = vextract.high.u32 %v132
    %v135 = vmul.u32.u64.compose %v131, %v126
    %v136 = vextract.low.u32 %v135
    %v137 = vextract.high.u32 %v135
    %v138 = vmul.u32 %v131, %v122
    %v139 = vadd.s32 %v134, %v136
    %vm140 = vc.u32 %v134, %v136
    %v141 = vadd.s32 %v137, 1
    %v142 = vsel %vm140, %v141, %v137
    %v143 = vadd.s32 %v138, %v142
    %v144 = vadd.s32 %v143, 536870912
    %v145 = vshrl.u32 %v144, 30
    %v146 = vshll.u32 %v145, 30
    %v147 = vsub.s32 %v143, %v146
    %vm148 = vcmp.lt.s32.totalorder %v147, 0
    %v149 = vsub.s32 0, %v147
    %v150 = vsel %vm148, %v149, %v147
    %v151 = vclz %v150
    %v152 = vsub.s32 %v151, 2
    %vm153 = vcmp.gt.s32.totalorder 0, %v152
    %v154 = vsel %vm153, 0, %v152
    %v155 = vsub.s32 32, %v154
    %v156 = vshll.u32 %v147, %v154
    %v157 = vshrl.u32 %v139, %v155
    %v158 = vor.u32 %v156, %v157
    %v159 = vsub.s32 4294967266, %v154
    %v160 = vadd.s32 %v159, 127
    %v161 = vshll.u32 %v160, 23
    %v162 = vor.u32 4788187, %v161
    %v163 = vand.u32 2147483647, %v162
    %v165 = vcvt.s32.f32 %v158
    %v166 = vmul.f32 %v165, %v163
    %v167 = vxor.u32 %v166, 2147483648
    %v168 = vsel %vm85, %v167, %v166
    %v169 = vsub.s32 4, %v145
    %v170 = vsel %vm85, %v169, %v145
    %v171 = vsel %vm84, %v80, %v168
    %v172 = vsel %vm84, 0, %v170
    %v173 = vcosq.f32.pop %v171
    %v174 = vsinq.f32.pop %v171
    %vm175 = vweird.f32 %v80
    %v176 = vadd.s32 %v172, 3
    %v177 = vand.u32 %v176, 3
    %vm178 = vcmp.lt.s32.totalorder %v177, 2
    %vm179 = vcmp.eq.s32.totalorder %v177, 0
    %v180 = vxor.u32 %v174, 2147483648
    %v181 = vsel %vm179, %v173, %v180
    %vm182 = vcmp.eq.s32.totalorder %v177, 2
    %v183 = vxor.u32 %v173, 2147483648
    %v184 = vsel %vm182, %v183, %v174
    %v185 = vsel %vm178, %v181, %v184
    %v186 = vsel %vm175, nan, %v185
    %v187 = vand.u32 2147483647, %v80
    %vm188 = vcmp.le.f32.partialorder %v187, 0.7853982
    %vm189 = vcmp.lt.s32.totalorder %v80, 0
    %v190 = vand.u32 %v80, 2139095040
    %v191 = vshrl.u32 %v190, 23
    %v192 = vsub.s32 %v191, 127
    %v193 = vand.u32 2147483647, %v80
    %v194 = vand.u32 %v193, 8388607
    %v195 = vor.u32 %v194, 8388608
    %v196 = vsub.s32 0, %v195
    %v197 = vadd.s32 %v192, 1
    %vm198 = vcmp.gt.s32.totalorder %v197, 0
    %v199 = vsel %vm198, %v197, 0
    %v200 = vshrl.u32 %v199, 5
    %v201 = vand.u32 %v199, 31
    %v202 = vsub.s32 32, %v201
    %v203 = vshrl.u32 683565275, %v202
    %v204 = vshll.u32 683565275, %v201
    %v205 = vshrl.u32 2475754826, %v202
    %v206 = vor.u32 %v204, %v205
    %v207 = vshll.u32 2475754826, %v201
    %v208 = vshrl.u32 2131351028, %v202
    %v209 = vor.u32 %v207, %v208
    %v210 = vshll.u32 2131351028, %v201
    %v211 = vshrl.u32 2102212464, %v202
    %v212 = vor.u32 %v210, %v211
    %v213 = vshll.u32 2102212464, %v201
    %v214 = vshrl.u32 920167782, %v202
    %v215 = vor.u32 %v213, %v214
    %v216 = vshll.u32 920167782, %v201
    %v217 = vshrl.u32 1326507024, %v202
    %v218 = vor.u32 %v216, %v217
    %vm219 = vcmp.lt.s32.totalorder %v200, 1
    %vm220 = vcmp.lt.s32.totalorder %v200, 2
    %vm221 = vcmp.lt.s32.totalorder %v200, 3
    %vm222 = vcmp.lt.s32.totalorder %v200, 4
    %v223 = vsel %vm219, %v203, %v206
    %v224 = vsel %vm222, %v212, 2102212464
    %v225 = vsel %vm221, %v209, %v224
    %v226 = vsel %vm220, %v223, %v225
    %v227 = vsel %vm219, %v206, %v209
    %v228 = vsel %vm222, %v215, 920167782
    %v229 = vsel %vm221, %v212, %v228
    %v230 = vsel %vm220, %v227, %v229
    %v231 = vsel %vm219, %v209, %v212
    %v232 = vsel %vm222, %v218, 1326507024
    %v233 = vsel %vm221, %v215, %v232
    %v234 = vsel %vm220, %v231, %v233
    %v235 = vshll.u32 %v195, 8
    %v236 = vmul.u32.u64.compose %v235, %v234
    %v237 = vextract.low.u32 %v236
    %v238 = vextract.high.u32 %v236
    %v239 = vmul.u32.u64.compose %v235, %v230
    %v240 = vextract.low.u32 %v239
    %v241 = vextract.high.u32 %v239
    %v242 = vmul.u32 %v235, %v226
    %v243 = vadd.s32 %v238, %v240
    %vm244 = vc.u32 %v238, %v240
    %v245 = vadd.s32 %v241, 1
    %v246 = vsel %vm244, %v245, %v241
    %v247 = vadd.s32 %v242, %v246
    %v248 = vadd.s32 %v247, 536870912
    %v249 = vshrl.u32 %v248, 30
    %v250 = vshll.u32 %v249, 30
    %v251 = vsub.s32 %v247, %v250
    %vm252 = vcmp.lt.s32.totalorder %v251, 0
    %v253 = vsub.s32 0, %v251
    %v254 = vsel %vm252, %v253, %v251
    %v255 = vclz %v254
    %v256 = vsub.s32 %v255, 2
    %vm257 = vcmp.gt.s32.totalorder 0, %v256
    %v258 = vsel %vm257, 0, %v256
    %v259 = vsub.s32 32, %v258
    %v260 = vshll.u32 %v251, %v258
    %v261 = vshrl.u32 %v243, %v259
    %v262 = vor.u32 %v260, %v261
    %v263 = vsub.s32 4294967266, %v258
    %v264 = vadd.s32 %v263, 127
    %v265 = vshll.u32 %v264, 23
    %v266 = vor.u32 4788187, %v265
    %v267 = vand.u32 2147483647, %v266
    %v269 = vcvt.s32.f32 %v262
    %v270 = vmul.f32 %v269, %v267
    %v271 = vxor.u32 %v270, 2147483648
    %v272 = vsel %vm189, %v271, %v270
    %v273 = vsub.s32 4, %v249
    %v274 = vsel %vm189, %v273, %v249
    %v275 = vsel %vm188, %v80, %v272
    %v276 = vsel %vm188, 0, %v274
    %v277 = vcosq.f32.pop %v275
    %v278 = vsinq.f32.pop %v275
    %vm279 = vweird.f32 %v80
    %v280 = vand.u32 %v276, 3
    %vm281 = vcmp.lt.s32.totalorder %v280, 2
    %vm282 = vcmp.eq.s32.totalorder %v280, 0
    %v283 = vxor.u32 %v278, 2147483648
    %v284 = vsel %vm282, %v277, %v283
    %vm285 = vcmp.eq.s32.totalorder %v280, 2
    %v286 = vxor.u32 %v277, 2147483648
    %v287 = vsel %vm285, %v286, %v278
    %v288 = vsel %vm281, %v284, %v287
    %v289 = vsel %vm279, nan, %v288
    %v290 = vsel %vm82, 1, 0
    %v291 = vlaneseq
    %v292 = vshrl.u32 %v291, 7
    %v293 = vsub.s32 0, %v292
    %v294 = vrot.slane %v290, %v293
    %vm295 = vcmp.eq.s32.totalorder %v294, 1
    %v296 = vsel %vm295, %v186, %v289
    %297 = vst [vmem:[#allocation7] sm:$0xf] %v296
    // Predicated region
    $region22: #{tpu_custom_call.1} parent=1 // pred_check
      _
    $region23: #{tpu_custom_call.1} parent=1 // pred_check_branch
      %299 = sbr.rel (0) target = $region25
    $region24: #{tpu_custom_call.1} parent=1 // pred_region
      %s301 = ssub.s32 64, 64
      %302 = vsyncadd [#allocation4], %s301
      %s304 = sshll.u32 [#allocation7], 4
      %s305 = int_to_ptr.vmem [resolvable:$true] %s304
      %307 = dma.vmem_to_hbm [thread:$0]  %s305, 64, %s3, [#allocation4]
    $region25: #{tpu_custom_call.1} parent=1 // pred_fallthru
      _
    // Predicated region
    $region26: #{tpu_custom_call.1} parent=1 // pred_check
      _
    $region27: #{tpu_custom_call.1} parent=1 // pred_check_branch
      %309 = sbr.rel (0) target = $region29
    $region28: #{tpu_custom_call.1} parent=1 // pred_region
      %310 = dma.done [#allocation4], 64
    $region29: #{tpu_custom_call.1} parent=1 // pred_fallthru
      _
    %311 = vsyncpa [#allocation3], 1
    %312 = vsyncpa [#allocation6], 1
    %313 = vsyncpa [#allocation4], 1

</llo_original>
